<compile_context>
chip_gen: v6e
topology: v6e:2x2x1
jax: 0.10.0
libtpu: 0.0.40
codegen_flags: <defaults>
</compile_context>

<pallas_src>
import functools

import jax
import jax.numpy as jnp
from jax.experimental import pallas as pl
from jax.experimental.pallas import tpu as pltpu

INPUT_SIZE = 784
HIDDEN = 50
HIDDEN_PAD = 64          # lane-friendly hidden width; extra rows/cols are zero
NUM_CLASSES = 10
K_LANES = 896            # 784 rounded up to 7*128: VMEM lane footprint of one x row


def _mlp_kernel(x_ref, w1_ref, b1_ref, w2_ref, b2_ref, o_ref):
    # fc1 on the MXU with f32 accumulation, bias + ReLU in f32 on the VPU.
    h = jnp.dot(x_ref[...], w1_ref[...], preferred_element_type=jnp.float32)
    h = jnp.maximum(h + b1_ref[...], 0.0)            # b1: (1, HIDDEN_PAD), broadcasts
    # fc2 is a tiny GEMM that hides under fc1's slack; match W2's dtype for the MXU.
    out = jnp.dot(h.astype(w2_ref.dtype), w2_ref[...],
                  preferred_element_type=jnp.float32)
    o_ref[...] = (out + b2_ref[...]).astype(o_ref.dtype)   # b2: (1, NUM_CLASSES)


def prepare_params(w1, b1, w2, b2, dtype=jnp.float32):
    """One-time weight prep: pad HIDDEN 50->64 with zeros, cast weights to `dtype`.

    w1: (784, 50), b1: (1, 50), w2: (50, 10), b2: (1, 10)  ->  padded/cast copies.
    Biases stay f32 (epilogue runs in f32 on all generations).
    """
    w1p = jnp.pad(w1, ((0, 0), (0, HIDDEN_PAD - HIDDEN))).astype(dtype)
    b1p = jnp.pad(b1, ((0, 0), (0, HIDDEN_PAD - HIDDEN))).astype(jnp.float32)
    w2p = jnp.pad(w2, ((0, HIDDEN_PAD - HIDDEN), (0, 0))).astype(dtype)
    b2p = b2.astype(jnp.float32)
    return w1p, b1p, w2p, b2p


@functools.partial(jax.jit, static_argnames=("block_b",))
def nn_forward(x, w1p, b1p, w2p, b2p, *, block_b=1024):
    """x: (B, 784) in f32 or bf16 (cast upstream at data prep) -> logits (B, 10) f32.

    w1p/b1p/w2p/b2p come from prepare_params().  Weights stay VMEM-resident;
    x streams per batch tile of `block_b` rows (multiple of 8).
    """
    B, K = x.shape
    assert K == INPUT_SIZE
    assert block_b % 8 == 0

    tb = min(block_b, B)
    grid = (pl.cdiv(B, tb),)

    x_item = jnp.dtype(x.dtype).itemsize
    w_item = jnp.dtype(w1p.dtype).itemsize

    # Accurate HBM traffic hint (x read + logits write + resident params once).
    cost = pl.CostEstimate(
        flops=2 * B * (INPUT_SIZE * HIDDEN_PAD + HIDDEN_PAD * NUM_CLASSES),
        bytes_accessed=(B * INPUT_SIZE * x_item
                        + B * NUM_CLASSES * 4
                        + (INPUT_SIZE * HIDDEN_PAD + HIDDEN_PAD * NUM_CLASSES) * w_item
                        + (HIDDEN_PAD + NUM_CLASSES) * 4),
        transcendentals=0,
    )

    # VMEM footprint of one pipeline state (lane-padded shapes), with headroom.
    vmem_bytes = (
        2 * tb * K_LANES * x_item          # x double buffer (784 -> 896 lanes)
        + 2 * tb * 128 * 4                 # out double buffer (10 -> 128 lanes)
        + 2 * (K_LANES * HIDDEN_PAD * w_item + HIDDEN_PAD * 128 * w_item)  # weights
        + tb * 128 * 4                     # h intermediate
        + (2 << 20)                        # slack
    )
    vmem_limit = min(max(vmem_bytes, 32 * 1024 * 1024), 64 * 1024 * 1024)

    return pl.pallas_call(
        _mlp_kernel,
        out_shape=jax.ShapeDtypeStruct((B, NUM_CLASSES), jnp.float32),
        grid=grid,
        in_specs=[
            # x: streamed per batch tile; last dim == full array dim (784) is legal.
            pl.BlockSpec((tb, INPUT_SIZE), lambda i: (i, 0)),
            # Params: resident across all batch tiles.
            pl.BlockSpec((INPUT_SIZE, HIDDEN_PAD), lambda i: (0, 0)),
            pl.BlockSpec((1, HIDDEN_PAD), lambda i: (0, 0)),
            pl.BlockSpec((HIDDEN_PAD, NUM_CLASSES), lambda i: (0, 0)),
            pl.BlockSpec((1, NUM_CLASSES), lambda i: (0, 0)),
        ],
        # Narrow output: block last dim == full array dim (10); masked stores hide
        # under the x DMA and cut output HBM bytes ~13x vs. the padded slab.
        out_specs=pl.BlockSpec((tb, NUM_CLASSES), lambda i: (i, 0)),
        compiler_params=pltpu.CompilerParams(
            dimension_semantics=("parallel",),   # batch tiles shard across TCs (v7x)
            vmem_limit_bytes=vmem_limit,
        ),
        cost_estimate=cost,
    )(x, w1p, b1p, w2p, b2p)


def init_params(key):
    """Deterministic init matching PyTorch nn.Linear (uniform +/- 1/sqrt(fan_in))."""
    k1, k2, k3, k4 = jax.random.split(key, 4)
    lim1 = 1.0 / jnp.sqrt(jnp.float32(INPUT_SIZE))
    lim2 = 1.0 / jnp.sqrt(jnp.float32(HIDDEN))
    w1 = jax.random.uniform(k1, (INPUT_SIZE, HIDDEN), jnp.float32, -lim1, lim1)
    b1 = jax.random.uniform(k2, (1, HIDDEN), jnp.float32, -lim1, lim1)
    w2 = jax.random.uniform(k3, (HIDDEN, NUM_CLASSES), jnp.float32, -lim2, lim2)
    b2 = jax.random.uniform(k4, (1, NUM_CLASSES), jnp.float32, -lim2, lim2)
    return w1, b1, w2, b2


if __name__ == "__main__":
    key = jax.random.PRNGKey(0)
    kx, kp = jax.random.split(key)
    w1, b1, w2, b2 = init_params(kp)

    # --- f32 path, B = 64 like the original module (single grid step) ---
    B = 64
    x = jax.random.normal(kx, (B, INPUT_SIZE), jnp.float32)
    p32 = prepare_params(w1, b1, w2, b2, dtype=jnp.float32)
    out = nn_forward(x, *p32, block_b=64)
    jax.block_until_ready(out)
    ref = jnp.maximum(x @ w1 + b1, 0.0) @ w2 + b2
    assert out.shape == (B, NUM_CLASSES)
    assert jnp.allclose(out, ref, atol=1e-4, rtol=1e-4)

    # --- multi-tile pipelined path, bf16 data prepared UPSTREAM (v6e/v7x fast path) ---
    # NOTE: bf16 quantizes x and the weights themselves (f32 accumulation/epilogue);
    # intended for inference-quality logits.
    B2 = 1024
    x2 = jax.random.normal(jax.random.PRNGKey(1), (B2, INPUT_SIZE), jnp.float32)
    x2_bf16 = x2.astype(jnp.bfloat16)                 # one-time data-prep cast, not per-call
    pbf = prepare_params(w1, b1, w2, b2, dtype=jnp.bfloat16)
    out2 = nn_forward(x2_bf16, *pbf, block_b=512)     # 2 grid steps -> megacore-shardable
    jax.block_until_ready(out2)
    ref2 = jnp.maximum(x2 @ w1 + b1, 0.0) @ w2 + b2
    assert out2.shape == (B2, NUM_CLASSES)
    assert jnp.allclose(out2, ref2, atol=5e-2, rtol=5e-2)

    print("KERNEL_OK")
</pallas_src>

<mosaic_0001>
module attributes {stable_mosaic.version = 11 : i64} {
  func.func @_mlp_kernel(%arg0: i32, %arg1: memref<64x784xf32, #tpu.memory_space<vmem>>, %arg2: memref<784x64xf32, #tpu.memory_space<vmem>>, %arg3: memref<1x64xf32, #tpu.memory_space<vmem>>, %arg4: memref<64x10xf32, #tpu.memory_space<vmem>>, %arg5: memref<1x10xf32, #tpu.memory_space<vmem>>, %arg6: memref<64x10xf32, #tpu.memory_space<vmem>>) attributes {dimension_semantics = [#tpu.dimension_semantics<parallel>], iteration_bounds = array<i64: 1>, scalar_prefetch = 0 : i64, scratch_operands = 0 : i64, tpu.core_type = #tpu.core_type<tc>, window_params = [{transform_indices = @transform_0, window_bounds = array<i64: 64, 784>}, {pipeline_mode = #tpu.pipeline_mode<synchronous>, transform_indices = @transform_1, window_bounds = array<i64: 784, 64>}, {pipeline_mode = #tpu.pipeline_mode<synchronous>, transform_indices = @transform_2, window_bounds = array<i64: 1, 64>}, {pipeline_mode = #tpu.pipeline_mode<synchronous>, transform_indices = @transform_3, window_bounds = array<i64: 64, 10>}, {pipeline_mode = #tpu.pipeline_mode<synchronous>, transform_indices = @transform_4, window_bounds = array<i64: 1, 10>}, {transform_indices = @transform_5, window_bounds = array<i64: 64, 10>}]} {
    %c0 = arith.constant 0 : index
    %c0_0 = arith.constant 0 : index
    %0 = vector.load %arg1[%c0, %c0_0] : memref<64x784xf32, #tpu.memory_space<vmem>>, vector<64x784xf32>
    %c0_1 = arith.constant 0 : index
    %c0_2 = arith.constant 0 : index
    %1 = vector.load %arg2[%c0_1, %c0_2] : memref<784x64xf32, #tpu.memory_space<vmem>>, vector<784x64xf32>
    %cst = arith.constant dense<0.000000e+00> : vector<64x64xf32>
    %2 = tpu.matmul %0, %1, %cst {dimension_numbers = #tpu.dot_dimension_numbers<[1], [0], [0], [1], [0, 0, 1, 1], [], []>} : vector<64x784xf32>, vector<784x64xf32>, vector<64x64xf32> -> vector<64x64xf32>
    %c0_3 = arith.constant 0 : index
    %c0_4 = arith.constant 0 : index
    %3 = vector.load %arg3[%c0_3, %c0_4] : memref<1x64xf32, #tpu.memory_space<vmem>>, vector<1x64xf32>
    %4 = vector.broadcast %3 : vector<1x64xf32> to vector<64x64xf32>
    %5 = arith.addf %2, %4 : vector<64x64xf32>
    %cst_5 = arith.constant 0.000000e+00 : f32
    %6 = vector.broadcast %cst_5 : f32 to vector<64x64xf32>
    %7 = arith.maximumf %5, %6 : vector<64x64xf32>
    %c0_6 = arith.constant 0 : index
    %c0_7 = arith.constant 0 : index
    %8 = vector.load %arg4[%c0_6, %c0_7] : memref<64x10xf32, #tpu.memory_space<vmem>>, vector<64x10xf32>
    %cst_8 = arith.constant dense<0.000000e+00> : vector<64x10xf32>
    %9 = tpu.matmul %7, %8, %cst_8 {dimension_numbers = #tpu.dot_dimension_numbers<[1], [0], [0], [1], [0, 0, 1, 1], [], []>} : vector<64x64xf32>, vector<64x10xf32>, vector<64x10xf32> -> vector<64x10xf32>
    %c0_9 = arith.constant 0 : index
    %c0_10 = arith.constant 0 : index
    %10 = vector.load %arg5[%c0_9, %c0_10] : memref<1x10xf32, #tpu.memory_space<vmem>>, vector<1x10xf32>
    %11 = vector.broadcast %10 : vector<1x10xf32> to vector<64x10xf32>
    %12 = arith.addf %9, %11 : vector<64x10xf32>
    %c0_11 = arith.constant 0 : index
    %c0_12 = arith.constant 0 : index
    %13 = vector.load %arg6[%c0_11, %c0_12] : memref<64x10xf32, #tpu.memory_space<vmem>>, vector<64x10xf32>
    tpu.vector_store %arg6[%c0_11, %c0_12], %12 {strides = array<i32>} : memref<64x10xf32, #tpu.memory_space<vmem>>, vector<64x10xf32>,
    return
  }
  func.func @transform_0(%arg0: i32) -> (i32, i32) {
    %c0_i32 = arith.constant 0 : i32
    %c0_i32_0 = arith.constant 0 : i32
    return %arg0, %c0_i32 : i32, i32
  }
  func.func @transform_1(%arg0: i32) -> (i32, i32) {
    %c0_i32 = arith.constant 0 : i32
    %c0_i32_0 = arith.constant 0 : i32
    %c0_i32_1 = arith.constant 0 : i32
    return %c0_i32, %c0_i32_0 : i32, i32
  }
  func.func @transform_2(%arg0: i32) -> (i32, i32) {
    %c0_i32 = arith.constant 0 : i32
    %c0_i32_0 = arith.constant 0 : i32
    %c0_i32_1 = arith.constant 0 : i32
    return %c0_i32, %c0_i32_0 : i32, i32
  }
  func.func @transform_3(%arg0: i32) -> (i32, i32) {
    %c0_i32 = arith.constant 0 : i32
    %c0_i32_0 = arith.constant 0 : i32
    %c0_i32_1 = arith.constant 0 : i32
    return %c0_i32, %c0_i32_0 : i32, i32
  }
  func.func @transform_4(%arg0: i32) -> (i32, i32) {
    %c0_i32 = arith.constant 0 : i32
    %c0_i32_0 = arith.constant 0 : i32
    %c0_i32_1 = arith.constant 0 : i32
    return %c0_i32, %c0_i32_0 : i32, i32
  }
  func.func @transform_5(%arg0: i32) -> (i32, i32) {
    %c0_i32 = arith.constant 0 : i32
    %c0_i32_0 = arith.constant 0 : i32
    return %arg0, %c0_i32 : i32, i32
  }
}

</mosaic_0001>

<llo_original>
// kernel: nn_forward.1
$region0: #{nn_forward.1}
  #allocation0 [shape = 'u32[]', space=smem, size = 0x4, offset = 0x4, fixed_abs, tag = 'smem constant byte address 0x4 - core index']
  #allocation1 [shape = 'u32[144,128]{1,0:T(1,128)}', space=vmem, size = 0x12000, scoped, tag = 'internal scratch']
  %s0 = inlined_call_operand.vmem [shape: f32[64,784], index: 0, kind: input, shape index: {}]
  %s1 = inlined_call_operand.vmem [shape: f32[784,64], index: 1, kind: input, shape index: {}]
  %s2 = inlined_call_operand.vmem [shape: f32[1,64], index: 2, kind: input, shape index: {}]
  %s3 = inlined_call_operand.vmem [shape: f32[64,10], index: 3, kind: input, shape index: {}]
  %s4 = inlined_call_operand.vmem [shape: f32[1,10], index: 4, kind: input, shape index: {}]
  %s5 = inlined_call_operand.vmem [shape: f32[64,10], index: 5, kind: output, shape index: {}]
  %s6 = sld [smem:[#allocation0]]
  $region30: #{nn_forward.1} parent=0
    _
  %s8 = ssub.s32 1, %s6
  %s9 = scalar_select 0, %s8, %s6
  // Predicated region
  $region2: #{nn_forward.1} parent=0 // pred_check
    _
  $region3: #{nn_forward.1} parent=0 // pred_check_branch
    %11 = sbr.rel (0) target = $region5
  $region4: #{nn_forward.1} parent=0 // pred_region
    _
  $region5: #{nn_forward.1} parent=0 // pred_fallthru
    _
  // Predicated region
  $region6: #{nn_forward.1} parent=0 // pred_check
    _
  $region7: #{nn_forward.1} parent=0 // pred_check_branch
    %13 = sbr.rel (0) target = $region9
  $region8: #{nn_forward.1} parent=0 // pred_region
    _
  $region9: #{nn_forward.1} parent=0 // pred_fallthru
    _
  // Predicated region
  $region10: #{nn_forward.1} parent=0 // pred_check
    _
  $region11: #{nn_forward.1} parent=0 // pred_check_branch
    %15 = sbr.rel (0) target = $region13
  $region12: #{nn_forward.1} parent=0 // pred_region
    _
  $region13: #{nn_forward.1} parent=0 // pred_fallthru
    _
  // Predicated region
  $region14: #{nn_forward.1} parent=0 // pred_check
    _
  $region15: #{nn_forward.1} parent=0 // pred_check_branch
    %17 = sbr.rel (0) target = $region17
  $region16: #{nn_forward.1} parent=0 // pred_region
    _
  $region17: #{nn_forward.1} parent=0 // pred_fallthru
    _
  // Predicated region
  $region18: #{nn_forward.1} parent=0 // pred_check
    _
  $region19: #{nn_forward.1} parent=0 // pred_check_branch
    %19 = sbr.rel (0) target = $region21
  $region20: #{nn_forward.1} parent=0 // pred_region
    _
  $region21: #{nn_forward.1} parent=0 // pred_fallthru
    _
  %v20 = vld [vmem:[%s0] sm:$0xff]
  %v21 = vld [vmem:[%s0 + $0x8] sm:$0xff]
  %v22 = vld [vmem:[%s0 + $0x10] sm:$0xff]
  %v23 = vld [vmem:[%s0 + $0x18] sm:$0xff]
  %v24 = vld [vmem:[%s0 + $0x20] sm:$0xff]
  %v25 = vld [vmem:[%s0 + $0x28] sm:$0xff]
  %v26 = vld [vmem:[%s0 + $0x30] sm:$0xff]
  %v27 = vld [vmem:[%s0 + $0x38] sm:$0xff]
  %v28 = vld [vmem:[%s0 + $0x40] sm:$0xff]
  %v29 = vld [vmem:[%s0 + $0x48] sm:$0xff]
  %v30 = vld [vmem:[%s0 + $0x50] sm:$0xff]
  %v31 = vld [vmem:[%s0 + $0x58] sm:$0xff]
  %v32 = vld [vmem:[%s0 + $0x60] sm:$0xff]
  %v33 = vld [vmem:[%s0 + $0x68] sm:$0xff]
  %v34 = vld [vmem:[%s0 + $0x70] sm:$0xff]
  %v35 = vld [vmem:[%s0 + $0x78] sm:$0xff]
  %v36 = vld [vmem:[%s0 + $0x80] sm:$0xff]
  %v37 = vld [vmem:[%s0 + $0x88] sm:$0xff]
  %v38 = vld [vmem:[%s0 + $0x90] sm:$0xff]
  %v39 = vld [vmem:[%s0 + $0x98] sm:$0xff]
  %v40 = vld [vmem:[%s0 + $0xa0] sm:$0xff]
  %v41 = vld [vmem:[%s0 + $0xa8] sm:$0xff]
  %v42 = vld [vmem:[%s0 + $0xb0] sm:$0xff]
  %v43 = vld [vmem:[%s0 + $0xb8] sm:$0xff]
  %v44 = vld [vmem:[%s0 + $0xc0] sm:$0xff]
  %v45 = vld [vmem:[%s0 + $0xc8] sm:$0xff]
  %v46 = vld [vmem:[%s0 + $0xd0] sm:$0xff]
  %v47 = vld [vmem:[%s0 + $0xd8] sm:$0xff]
  %v48 = vld [vmem:[%s0 + $0xe0] sm:$0xff]
  %v49 = vld [vmem:[%s0 + $0xe8] sm:$0xff]
  %v50 = vld [vmem:[%s0 + $0xf0] sm:$0xff]
  %v51 = vld [vmem:[%s0 + $0xf8] sm:$0xff]
  %v52 = vld [vmem:[%s0 + $0x100] sm:$0xff]
  %v53 = vld [vmem:[%s0 + $0x108] sm:$0xff]
  %v54 = vld [vmem:[%s0 + $0x110] sm:$0xff]
  %v55 = vld [vmem:[%s0 + $0x118] sm:$0xff]
  %v56 = vld [vmem:[%s0 + $0x120] sm:$0xff]
  %v57 = vld [vmem:[%s0 + $0x128] sm:$0xff]
  %v58 = vld [vmem:[%s0 + $0x130] sm:$0xff]
  %v59 = vld [vmem:[%s0 + $0x138] sm:$0xff]
  %v60 = vld [vmem:[%s0 + $0x140] sm:$0xff]
  %v61 = vld [vmem:[%s0 + $0x148] sm:$0xff]
  %v62 = vld [vmem:[%s0 + $0x150] sm:$0xff]
  %v63 = vld [vmem:[%s0 + $0x158] sm:$0xff]
  %v64 = vld [vmem:[%s0 + $0x160] sm:$0xff]
  %v65 = vld [vmem:[%s0 + $0x168] sm:$0xff]
  %v66 = vld [vmem:[%s0 + $0x170] sm:$0xff]
  %v67 = vld [vmem:[%s0 + $0x178] sm:$0xff]
  %v68 = vld [vmem:[%s0 + $0x180] sm:$0xff]
  %v69 = vld [vmem:[%s0 + $0x188] sm:$0xff]
  %v70 = vld [vmem:[%s0 + $0x190] sm:$0xff]
  %v71 = vld [vmem:[%s0 + $0x198] sm:$0xff]
  %v72 = vld [vmem:[%s0 + $0x1a0] sm:$0xff]
  %v73 = vld [vmem:[%s0 + $0x1a8] sm:$0xff]
  %v74 = vld [vmem:[%s0 + $0x1b0] sm:$0xff]
  %v75 = vld [vmem:[%s0 + $0x1b8] sm:$0xff]
  %v76 = vld [vmem:[%s1] sm:$0xff]
  %v77 = vld [vmem:[%s1 + $0x8] sm:$0xff]
  %v78 = vld [vmem:[%s1 + $0x10] sm:$0xff]
  %v79 = vld [vmem:[%s1 + $0x18] sm:$0xff]
  %v80 = vld [vmem:[%s1 + $0x20] sm:$0xff]
  %v81 = vld [vmem:[%s1 + $0x28] sm:$0xff]
  %v82 = vld [vmem:[%s1 + $0x30] sm:$0xff]
  %v83 = vld [vmem:[%s1 + $0x38] sm:$0xff]
  %v84 = vld [vmem:[%s1 + $0x40] sm:$0xff]
  %v85 = vld [vmem:[%s1 + $0x48] sm:$0xff]
  %v86 = vld [vmem:[%s1 + $0x50] sm:$0xff]
  %v87 = vld [vmem:[%s1 + $0x58] sm:$0xff]
  %v88 = vld [vmem:[%s1 + $0x60] sm:$0xff]
  %v89 = vld [vmem:[%s1 + $0x68] sm:$0xff]
  %v90 = vld [vmem:[%s1 + $0x70] sm:$0xff]
  %v91 = vld [vmem:[%s1 + $0x78] sm:$0xff]
  %v92 = vld [vmem:[%s1 + $0x80] sm:$0xff]
  %v93 = vld [vmem:[%s1 + $0x88] sm:$0xff]
  %v94 = vld [vmem:[%s1 + $0x90] sm:$0xff]
  %v95 = vld [vmem:[%s1 + $0x98] sm:$0xff]
  %v96 = vld [vmem:[%s1 + $0xa0] sm:$0xff]
  %v97 = vld [vmem:[%s1 + $0xa8] sm:$0xff]
  %v98 = vld [vmem:[%s1 + $0xb0] sm:$0xff]
  %v99 = vld [vmem:[%s1 + $0xb8] sm:$0xff]
  %v100 = vld [vmem:[%s1 + $0xc0] sm:$0xff]
  %v101 = vld [vmem:[%s1 + $0xc8] sm:$0xff]
  %v102 = vld [vmem:[%s1 + $0xd0] sm:$0xff]
  %v103 = vld [vmem:[%s1 + $0xd8] sm:$0xff]
  %v104 = vld [vmem:[%s1 + $0xe0] sm:$0xff]
  %v105 = vld [vmem:[%s1 + $0xe8] sm:$0xff]
  %v106 = vld [vmem:[%s1 + $0xf0] sm:$0xff]
  %v107 = vld [vmem:[%s1 + $0xf8] sm:$0xff]
  %v108 = vld [vmem:[%s1 + $0x100] sm:$0xff]
  %v109 = vld [vmem:[%s1 + $0x108] sm:$0xff]
  %v110 = vld [vmem:[%s1 + $0x110] sm:$0xff]
  %v111 = vld [vmem:[%s1 + $0x118] sm:$0xff]
  %v112 = vld [vmem:[%s1 + $0x120] sm:$0xff]
  %v113 = vld [vmem:[%s1 + $0x128] sm:$0xff]
  %v114 = vld [vmem:[%s1 + $0x130] sm:$0xff]
  %v115 = vld [vmem:[%s1 + $0x138] sm:$0xff]
  %v116 = vld [vmem:[%s1 + $0x140] sm:$0xff]
  %v117 = vld [vmem:[%s1 + $0x148] sm:$0xff]
  %v118 = vld [vmem:[%s1 + $0x150] sm:$0xff]
  %v119 = vld [vmem:[%s1 + $0x158] sm:$0xff]
  %v120 = vld [vmem:[%s1 + $0x160] sm:$0xff]
  %v121 = vld [vmem:[%s1 + $0x168] sm:$0xff]
  %v122 = vld [vmem:[%s1 + $0x170] sm:$0xff]
  %v123 = vld [vmem:[%s1 + $0x178] sm:$0xff]
  %v124 = vld [vmem:[%s1 + $0x180] sm:$0xff]
  %v125 = vld [vmem:[%s1 + $0x188] sm:$0xff]
  %v126 = vld [vmem:[%s1 + $0x190] sm:$0xff]
  %v127 = vld [vmem:[%s1 + $0x198] sm:$0xff]
  %v128 = vld [vmem:[%s1 + $0x1a0] sm:$0xff]
  %v129 = vld [vmem:[%s1 + $0x1a8] sm:$0xff]
  %v130 = vld [vmem:[%s1 + $0x1b0] sm:$0xff]
  %v131 = vld [vmem:[%s1 + $0x1b8] sm:$0xff]
  %v132 = vld [vmem:[%s1 + $0x1c0] sm:$0xff]
  %v133 = vld [vmem:[%s1 + $0x1c8] sm:$0xff]
  %v134 = vld [vmem:[%s1 + $0x1d0] sm:$0xff]
  %v135 = vld [vmem:[%s1 + $0x1d8] sm:$0xff]
  %v136 = vld [vmem:[%s1 + $0x1e0] sm:$0xff]
  %v137 = vld [vmem:[%s1 + $0x1e8] sm:$0xff]
  %v138 = vld [vmem:[%s1 + $0x1f0] sm:$0xff]
  %v139 = vld [vmem:[%s1 + $0x1f8] sm:$0xff]
  %v140 = vld [vmem:[%s1 + $0x200] sm:$0xff]
  %v141 = vld [vmem:[%s1 + $0x208] sm:$0xff]
  %v142 = vld [vmem:[%s1 + $0x210] sm:$0xff]
  %v143 = vld [vmem:[%s1 + $0x218] sm:$0xff]
  %v144 = vld [vmem:[%s1 + $0x220] sm:$0xff]
  %v145 = vld [vmem:[%s1 + $0x228] sm:$0xff]
  %v146 = vld [vmem:[%s1 + $0x230] sm:$0xff]
  %v147 = vld [vmem:[%s1 + $0x238] sm:$0xff]
  %v148 = vld [vmem:[%s1 + $0x240] sm:$0xff]
  %v149 = vld [vmem:[%s1 + $0x248] sm:$0xff]
  %v150 = vld [vmem:[%s1 + $0x250] sm:$0xff]
  %v151 = vld [vmem:[%s1 + $0x258] sm:$0xff]
  %v152 = vld [vmem:[%s1 + $0x260] sm:$0xff]
  %v153 = vld [vmem:[%s1 + $0x268] sm:$0xff]
  %v154 = vld [vmem:[%s1 + $0x270] sm:$0xff]
  %v155 = vld [vmem:[%s1 + $0x278] sm:$0xff]
  %v156 = vld [vmem:[%s1 + $0x280] sm:$0xff]
  %v157 = vld [vmem:[%s1 + $0x288] sm:$0xff]
  %v158 = vld [vmem:[%s1 + $0x290] sm:$0xff]
  %v159 = vld [vmem:[%s1 + $0x298] sm:$0xff]
  %v160 = vld [vmem:[%s1 + $0x2a0] sm:$0xff]
  %v161 = vld [vmem:[%s1 + $0x2a8] sm:$0xff]
  %v162 = vld [vmem:[%s1 + $0x2b0] sm:$0xff]
  %v163 = vld [vmem:[%s1 + $0x2b8] sm:$0xff]
  %v164 = vld [vmem:[%s1 + $0x2c0] sm:$0xff]
  %v165 = vld [vmem:[%s1 + $0x2c8] sm:$0xff]
  %v166 = vld [vmem:[%s1 + $0x2d0] sm:$0xff]
  %v167 = vld [vmem:[%s1 + $0x2d8] sm:$0xff]
  %v168 = vld [vmem:[%s1 + $0x2e0] sm:$0xff]
  %v169 = vld [vmem:[%s1 + $0x2e8] sm:$0xff]
  %v170 = vld [vmem:[%s1 + $0x2f0] sm:$0xff]
  %v171 = vld [vmem:[%s1 + $0x2f8] sm:$0xff]
  %v172 = vld [vmem:[%s1 + $0x300] sm:$0xff]
  %v173 = vld [vmem:[%s1 + $0x308] sm:$0xff]
  %v174 = vld [vmem:[%s2] sm:$0x1]
  %v176 = vlaneseq
  %v177 = vshrl.u32 %v176, 7
  %v178 = vsub.s32 0, %v177
  %v179 = vrot.slane %v174, %v178
  %vm181 = vcmask 130048
  %v183 = vsel %vm181, %v26, 0
  %v186 = vsel %vm181, %v33, 0
  %v189 = vsel %vm181, %v40, 0
  %v192 = vsel %vm181, %v47, 0
  %v195 = vsel %vm181, %v54, 0
  %v198 = vsel %vm181, %v61, 0
  %v201 = vsel %vm181, %v68, 0
  %v204 = vsel %vm181, %v75, 0
  %206 = vmatprep.subr.mxu0 0.0
  %207 = vmatpush1.msra.mxu0 %v91
  %208 = vmatprep.subr.mxu0 0.0
  %209 = vmatpush1.msra.mxu0 %v90
  %210 = vmatprep.subr.mxu0 0.0
  %211 = vmatpush1.msra.mxu0 %v89
  %212 = vmatprep.subr.mxu0 0.0
  %213 = vmatpush1.msra.mxu0 %v88
  %214 = vmatprep.subr.mxu0 0.0
  %215 = vmatpush1.msra.mxu0 %v87
  %216 = vmatprep.subr.mxu0 0.0
  %217 = vmatpush1.msra.mxu0 %v86
  %218 = vmatprep.subr.mxu0 0.0
  %219 = vmatpush1.msra.mxu0 %v85
  %220 = vmatprep.subr.mxu0 0.0
  %221 = vmatpush1.msra.mxu0 %v84
  %222 = vmatprep.subr.mxu0 0.0
  %223 = vmatpush1.msra.mxu0 %v83
  %224 = vmatprep.subr.mxu0 0.0
  %225 = vmatpush1.msra.mxu0 %v82
  %226 = vmatprep.subr.mxu0 0.0
  %227 = vmatpush1.msra.mxu0 %v81
  %228 = vmatprep.subr.mxu0 0.0
  %229 = vmatpush1.msra.mxu0 %v80
  %230 = vmatprep.subr.mxu0 0.0
  %231 = vmatpush1.msra.mxu0 %v79
  %232 = vmatprep.subr.mxu0 0.0
  %233 = vmatpush1.msra.mxu0 %v78
  %234 = vmatprep.subr.mxu0 0.0
  %235 = vmatpush1.msra.mxu0 %v77
  %236 = vmatprep.subr.mxu0 0.0
  %237 = vmatpush1.msra.mxu0 %v76
  %238 = vmatprep.subr.mxu0 0.0
  %239 = vmatpush2.msra.mxu0 %v107
  %240 = vmatprep.subr.mxu0 0.0
  %241 = vmatpush2.msra.mxu0 %v106
  %242 = vmatprep.subr.mxu0 0.0
  %243 = vmatpush2.msra.mxu0 %v105
  %244 = vmatprep.subr.mxu0 0.0
  %245 = vmatpush2.msra.mxu0 %v104
  %246 = vmatprep.subr.mxu0 0.0
  %247 = vmatpush2.msra.mxu0 %v103
  %248 = vmatprep.subr.mxu0 0.0
  %249 = vmatpush2.msra.mxu0 %v102
  %250 = vmatprep.subr.mxu0 0.0
  %251 = vmatpush2.msra.mxu0 %v101
  %252 = vmatprep.subr.mxu0 0.0
  %253 = vmatpush2.msra.mxu0 %v100
  %254 = vmatprep.subr.mxu0 0.0
  %255 = vmatpush2.msra.mxu0 %v99
  %256 = vmatprep.subr.mxu0 0.0
  %257 = vmatpush2.msra.mxu0 %v98
  %258 = vmatprep.subr.mxu0 0.0
  %259 = vmatpush2.msra.mxu0 %v97
  %260 = vmatprep.subr.mxu0 0.0
  %261 = vmatpush2.msra.mxu0 %v96
  %262 = vmatprep.subr.mxu0 0.0
  %263 = vmatpush2.msra.mxu0 %v95
  %264 = vmatprep.subr.mxu0 0.0
  %265 = vmatpush2.msra.mxu0 %v94
  %266 = vmatprep.subr.mxu0 0.0
  %267 = vmatpush2.msra.mxu0 %v93
  %268 = vmatprep.subr.mxu0 0.0
  %269 = vmatpush2.msra.mxu0 %v92
  %270 = vmatprep.mubr.f32.mxu0 %v21
  %271 = vmatmul.mubr.f32.gmra.mxu0 %v20
  %v272 = vpop.f32.mrf.mxu0
  %v273 = vadd.f32 %v179, %v272
  %v274 = vpop.f32.mrf.mxu0
  %275 = vmatprep.mubr.f32.mxu0 %v28
  %276 = vmatmul.mubr.f32.gmra.mxu0 %v27
  %v277 = vpop.f32.mrf.mxu0
  %v278 = vadd.f32 %v179, %v277
  %v279 = vpop.f32.mrf.mxu0
  %280 = vmatprep.mubr.f32.mxu0 %v35
  %281 = vmatmul.mubr.f32.gmra.mxu0 %v34
  %v282 = vpop.f32.mrf.mxu0
  %v283 = vadd.f32 %v179, %v282
  %v284 = vpop.f32.mrf.mxu0
  %285 = vmatprep.mubr.f32.mxu0 %v42
  %286 = vmatmul.mubr.f32.gmra.mxu0 %v41
  %v287 = vpop.f32.mrf.mxu0
  %v288 = vadd.f32 %v179, %v287
  %v289 = vpop.f32.mrf.mxu0
  %290 = vmatprep.mubr.f32.mxu0 %v49
  %291 = vmatmul.mubr.f32.gmra.mxu0 %v48
  %v292 = vpop.f32.mrf.mxu0
  %v293 = vadd.f32 %v179, %v292
  %v294 = vpop.f32.mrf.mxu0
  %295 = vmatprep.mubr.f32.mxu0 %v56
  %296 = vmatmul.mubr.f32.gmra.mxu0 %v55
  %v297 = vpop.f32.mrf.mxu0
  %v298 = vadd.f32 %v179, %v297
  %v299 = vpop.f32.mrf.mxu0
  %300 = vmatprep.mubr.f32.mxu0 %v63
  %301 = vmatmul.mubr.f32.gmra.mxu0 %v62
  %v302 = vpop.f32.mrf.mxu0
  %v303 = vadd.f32 %v179, %v302
  %v304 = vpop.f32.mrf.mxu0
  %305 = vmatprep.mubr.f32.mxu0 %v70
  %306 = vmatmul.mubr.f32.gmra.mxu0 %v69
  %v307 = vpop.f32.mrf.mxu0
  %v308 = vadd.f32 %v179, %v307
  %v309 = vpop.f32.mrf.mxu0
  %310 = vdwg.mxu0
  %311 = vmatprep.subr.mxu0 0.0
  %312 = vmatpush1.msra.mxu0 %v123
  %313 = vmatprep.subr.mxu0 0.0
  %314 = vmatpush1.msra.mxu0 %v122
  %315 = vmatprep.subr.mxu0 0.0
  %316 = vmatpush1.msra.mxu0 %v121
  %317 = vmatprep.subr.mxu0 0.0
  %318 = vmatpush1.msra.mxu0 %v120
  %319 = vmatprep.subr.mxu0 0.0
  %320 = vmatpush1.msra.mxu0 %v119
  %321 = vmatprep.subr.mxu0 0.0
  %322 = vmatpush1.msra.mxu0 %v118
  %323 = vmatprep.subr.mxu0 0.0
  %324 = vmatpush1.msra.mxu0 %v117
  %325 = vmatprep.subr.mxu0 0.0
  %326 = vmatpush1.msra.mxu0 %v116
  %327 = vmatprep.subr.mxu0 0.0
  %328 = vmatpush1.msra.mxu0 %v115
  %329 = vmatprep.subr.mxu0 0.0
  %330 = vmatpush1.msra.mxu0 %v114
  %331 = vmatprep.subr.mxu0 0.0
  %332 = vmatpush1.msra.mxu0 %v113
  %333 = vmatprep.subr.mxu0 0.0
  %334 = vmatpush1.msra.mxu0 %v112
  %335 = vmatprep.subr.mxu0 0.0
  %336 = vmatpush1.msra.mxu0 %v111
  %337 = vmatprep.subr.mxu0 0.0
  %338 = vmatpush1.msra.mxu0 %v110
  %339 = vmatprep.subr.mxu0 0.0
  %340 = vmatpush1.msra.mxu0 %v109
  %341 = vmatprep.subr.mxu0 0.0
  %342 = vmatpush1.msra.mxu0 %v108
  %343 = vmatprep.subr.mxu0 0.0
  %344 = vmatpush2.msra.mxu0 %v139
  %345 = vmatprep.subr.mxu0 0.0
  %346 = vmatpush2.msra.mxu0 %v138
  %347 = vmatprep.subr.mxu0 0.0
  %348 = vmatpush2.msra.mxu0 %v137
  %349 = vmatprep.subr.mxu0 0.0
  %350 = vmatpush2.msra.mxu0 %v136
  %351 = vmatprep.subr.mxu0 0.0
  %352 = vmatpush2.msra.mxu0 %v135
  %353 = vmatprep.subr.mxu0 0.0
  %354 = vmatpush2.msra.mxu0 %v134
  %355 = vmatprep.subr.mxu0 0.0
  %356 = vmatpush2.msra.mxu0 %v133
  %357 = vmatprep.subr.mxu0 0.0
  %358 = vmatpush2.msra.mxu0 %v132
  %359 = vmatprep.subr.mxu0 0.0
  %360 = vmatpush2.msra.mxu0 %v131
  %361 = vmatprep.subr.mxu0 0.0
  %362 = vmatpush2.msra.mxu0 %v130
  %363 = vmatprep.subr.mxu0 0.0
  %364 = vmatpush2.msra.mxu0 %v129
  %365 = vmatprep.subr.mxu0 0.0
  %366 = vmatpush2.msra.mxu0 %v128
  %367 = vmatprep.subr.mxu0 0.0
  %368 = vmatpush2.msra.mxu0 %v127
  %369 = vmatprep.subr.mxu0 0.0
  %370 = vmatpush2.msra.mxu0 %v126
  %371 = vmatprep.subr.mxu0 0.0
  %372 = vmatpush2.msra.mxu0 %v125
  %373 = vmatprep.subr.mxu0 0.0
  %374 = vmatpush2.msra.mxu0 %v124
  %375 = vmatprep.mubr.f32.mxu0 %v23
  %376 = vmatmul.mubr.f32.gmra.mxu0 %v22
  %v377 = vpop.f32.mrf.mxu0
  %v378 = vadd.f32 %v273, %v377
  %v379 = vpop.f32.mrf.mxu0
  %380 = vmatprep.mubr.f32.mxu0 %v30
  %381 = vmatmul.mubr.f32.gmra.mxu0 %v29
  %v382 = vpop.f32.mrf.mxu0
  %v383 = vadd.f32 %v278, %v382
  %v384 = vpop.f32.mrf.mxu0
  %385 = vmatprep.mubr.f32.mxu0 %v37
  %386 = vmatmul.mubr.f32.gmra.mxu0 %v36
  %v387 = vpop.f32.mrf.mxu0
  %v388 = vadd.f32 %v283, %v387
  %v389 = vpop.f32.mrf.mxu0
  %390 = vmatprep.mubr.f32.mxu0 %v44
  %391 = vmatmul.mubr.f32.gmra.mxu0 %v43
  %v392 = vpop.f32.mrf.mxu0
  %v393 = vadd.f32 %v288, %v392
  %v394 = vpop.f32.mrf.mxu0
  %395 = vmatprep.mubr.f32.mxu0 %v51
  %396 = vmatmul.mubr.f32.gmra.mxu0 %v50
  %v397 = vpop.f32.mrf.mxu0
  %v398 = vadd.f32 %v293, %v397
  %v399 = vpop.f32.mrf.mxu0
  %400 = vmatprep.mubr.f32.mxu0 %v58
  %401 = vmatmul.mubr.f32.gmra.mxu0 %v57
  %v402 = vpop.f32.mrf.mxu0
  %v403 = vadd.f32 %v298, %v402
  %v404 = vpop.f32.mrf.mxu0
  %405 = vmatprep.mubr.f32.mxu0 %v65
  %406 = vmatmul.mubr.f32.gmra.mxu0 %v64
  %v407 = vpop.f32.mrf.mxu0
  %v408 = vadd.f32 %v303, %v407
  %v409 = vpop.f32.mrf.mxu0
  %410 = vmatprep.mubr.f32.mxu0 %v72
  %411 = vmatmul.mubr.f32.gmra.mxu0 %v71
  %v412 = vpop.f32.mrf.mxu0
  %v413 = vadd.f32 %v308, %v412
  %v414 = vpop.f32.mrf.mxu0
  %415 = vdwg.mxu0
  %416 = vmatprep.subr.mxu0 0.0
  %417 = vmatpush1.msra.mxu0 %v155
  %418 = vmatprep.subr.mxu0 0.0
  %419 = vmatpush1.msra.mxu0 %v154
  %420 = vmatprep.subr.mxu0 0.0
  %421 = vmatpush1.msra.mxu0 %v153
  %422 = vmatprep.subr.mxu0 0.0
  %423 = vmatpush1.msra.mxu0 %v152
  %424 = vmatprep.subr.mxu0 0.0
  %425 = vmatpush1.msra.mxu0 %v151
  %426 = vmatprep.subr.mxu0 0.0
  %427 = vmatpush1.msra.mxu0 %v150
  %428 = vmatprep.subr.mxu0 0.0
  %429 = vmatpush1.msra.mxu0 %v149
  %430 = vmatprep.subr.mxu0 0.0
  %431 = vmatpush1.msra.mxu0 %v148
  %432 = vmatprep.subr.mxu0 0.0
  %433 = vmatpush1.msra.mxu0 %v147
  %434 = vmatprep.subr.mxu0 0.0
  %435 = vmatpush1.msra.mxu0 %v146
  %436 = vmatprep.subr.mxu0 0.0
  %437 = vmatpush1.msra.mxu0 %v145
  %438 = vmatprep.subr.mxu0 0.0
  %439 = vmatpush1.msra.mxu0 %v144
  %440 = vmatprep.subr.mxu0 0.0
  %441 = vmatpush1.msra.mxu0 %v143
  %442 = vmatprep.subr.mxu0 0.0
  %443 = vmatpush1.msra.mxu0 %v142
  %444 = vmatprep.subr.mxu0 0.0
  %445 = vmatpush1.msra.mxu0 %v141
  %446 = vmatprep.subr.mxu0 0.0
  %447 = vmatpush1.msra.mxu0 %v140
  %448 = vmatprep.subr.mxu0 0.0
  %449 = vmatpush2.msra.mxu0 %v171
  %450 = vmatprep.subr.mxu0 0.0
  %451 = vmatpush2.msra.mxu0 %v170
  %452 = vmatprep.subr.mxu0 0.0
  %453 = vmatpush2.msra.mxu0 %v169
  %454 = vmatprep.subr.mxu0 0.0
  %455 = vmatpush2.msra.mxu0 %v168
  %456 = vmatprep.subr.mxu0 0.0
  %457 = vmatpush2.msra.mxu0 %v167
  %458 = vmatprep.subr.mxu0 0.0
  %459 = vmatpush2.msra.mxu0 %v166
  %460 = vmatprep.subr.mxu0 0.0
  %461 = vmatpush2.msra.mxu0 %v165
  %462 = vmatprep.subr.mxu0 0.0
  %463 = vmatpush2.msra.mxu0 %v164
  %464 = vmatprep.subr.mxu0 0.0
  %465 = vmatpush2.msra.mxu0 %v163
  %466 = vmatprep.subr.mxu0 0.0
  %467 = vmatpush2.msra.mxu0 %v162
  %468 = vmatprep.subr.mxu0 0.0
  %469 = vmatpush2.msra.mxu0 %v161
  %470 = vmatprep.subr.mxu0 0.0
  %471 = vmatpush2.msra.mxu0 %v160
  %472 = vmatprep.subr.mxu0 0.0
  %473 = vmatpush2.msra.mxu0 %v159
  %474 = vmatprep.subr.mxu0 0.0
  %475 = vmatpush2.msra.mxu0 %v158
  %476 = vmatprep.subr.mxu0 0.0
  %477 = vmatpush2.msra.mxu0 %v157
  %478 = vmatprep.subr.mxu0 0.0
  %479 = vmatpush2.msra.mxu0 %v156
  %480 = vmatprep.mubr.f32.mxu0 %v25
  %481 = vmatmul.mubr.f32.gmra.mxu0 %v24
  %v482 = vpop.f32.mrf.mxu0
  %v483 = vadd.f32 %v378, %v482
  %v484 = vpop.f32.mrf.mxu0
  %485 = vmatprep.mubr.f32.mxu0 %v32
  %486 = vmatmul.mubr.f32.gmra.mxu0 %v31
  %v487 = vpop.f32.mrf.mxu0
  %v488 = vadd.f32 %v383, %v487
  %v489 = vpop.f32.mrf.mxu0
  %490 = vmatprep.mubr.f32.mxu0 %v39
  %491 = vmatmul.mubr.f32.gmra.mxu0 %v38
  %v492 = vpop.f32.mrf.mxu0
  %v493 = vadd.f32 %v388, %v492
  %v494 = vpop.f32.mrf.mxu0
  %495 = vmatprep.mubr.f32.mxu0 %v46
  %496 = vmatmul.mubr.f32.gmra.mxu0 %v45
  %v497 = vpop.f32.mrf.mxu0
  %v498 = vadd.f32 %v393, %v497
  %v499 = vpop.f32.mrf.mxu0
  %500 = vmatprep.mubr.f32.mxu0 %v53
  %501 = vmatmul.mubr.f32.gmra.mxu0 %v52
  %v502 = vpop.f32.mrf.mxu0
  %v503 = vadd.f32 %v398, %v502
  %v504 = vpop.f32.mrf.mxu0
  %505 = vmatprep.mubr.f32.mxu0 %v60
  %506 = vmatmul.mubr.f32.gmra.mxu0 %v59
  %v507 = vpop.f32.mrf.mxu0
  %v508 = vadd.f32 %v403, %v507
  %v509 = vpop.f32.mrf.mxu0
  %510 = vmatprep.mubr.f32.mxu0 %v67
  %511 = vmatmul.mubr.f32.gmra.mxu0 %v66
  %v512 = vpop.f32.mrf.mxu0
  %v513 = vadd.f32 %v408, %v512
  %v514 = vpop.f32.mrf.mxu0
  %515 = vmatprep.mubr.f32.mxu0 %v74
  %516 = vmatmul.mubr.f32.gmra.mxu0 %v73
  %v517 = vpop.f32.mrf.mxu0
  %v518 = vadd.f32 %v413, %v517
  %v519 = vpop.f32.mrf.mxu0
  %520 = vdwg.mxu0
  %521 = vmatprep.subr.mxu0 0.0
  %522 = vmatpush1.msra.mxu0 0.0
  %523 = vmatprep.subr.mxu0 0.0
  %524 = vmatpush1.msra.mxu0 0.0
  %525 = vmatprep.subr.mxu0 0.0
  %526 = vmatpush1.msra.mxu0 0.0
  %527 = vmatprep.subr.mxu0 0.0
  %528 = vmatpush1.msra.mxu0 0.0
  %529 = vmatprep.subr.mxu0 0.0
  %530 = vmatpush1.msra.mxu0 0.0
  %531 = vmatprep.subr.mxu0 0.0
  %532 = vmatpush1.msra.mxu0 0.0
  %533 = vmatprep.subr.mxu0 0.0
  %534 = vmatpush1.msra.mxu0 0.0
  %535 = vmatprep.subr.mxu0 0.0
  %536 = vmatpush1.msra.mxu0 0.0
  %537 = vmatprep.subr.mxu0 0.0
  %538 = vmatpush1.msra.mxu0 0.0
  %539 = vmatprep.subr.mxu0 0.0
  %540 = vmatpush1.msra.mxu0 0.0
  %541 = vmatprep.subr.mxu0 0.0
  %542 = vmatpush1.msra.mxu0 0.0
  %543 = vmatprep.subr.mxu0 0.0
  %544 = vmatpush1.msra.mxu0 0.0
  %545 = vmatprep.subr.mxu0 0.0
  %546 = vmatpush1.msra.mxu0 0.0
  %547 = vmatprep.subr.mxu0 0.0
  %548 = vmatpush1.msra.mxu0 0.0
  %549 = vmatprep.subr.mxu0 0.0
  %550 = vmatpush1.msra.mxu0 %v173
  %551 = vmatprep.subr.mxu0 0.0
  %552 = vmatpush1.msra.mxu0 %v172
  %553 = vmatprep.subr.mxu0 0.0
  %554 = vmatpush2.msra.mxu0 0.0
  %555 = vmatprep.subr.mxu0 0.0
  %556 = vmatpush2.msra.mxu0 0.0
  %557 = vmatprep.subr.mxu0 0.0
  %558 = vmatpush2.msra.mxu0 0.0
  %559 = vmatprep.subr.mxu0 0.0
  %560 = vmatpush2.msra.mxu0 0.0
  %561 = vmatprep.subr.mxu0 0.0
  %562 = vmatpush2.msra.mxu0 0.0
  %563 = vmatprep.subr.mxu0 0.0
  %564 = vmatpush2.msra.mxu0 0.0
  %565 = vmatprep.subr.mxu0 0.0
  %566 = vmatpush2.msra.mxu0 0.0
  %567 = vmatprep.subr.mxu0 0.0
  %568 = vmatpush2.msra.mxu0 0.0
  %569 = vmatprep.subr.mxu0 0.0
  %570 = vmatpush2.msra.mxu0 0.0
  %571 = vmatprep.subr.mxu0 0.0
  %572 = vmatpush2.msra.mxu0 0.0
  %573 = vmatprep.subr.mxu0 0.0
  %574 = vmatpush2.msra.mxu0 0.0
  %575 = vmatprep.subr.mxu0 0.0
  %576 = vmatpush2.msra.mxu0 0.0
  %577 = vmatprep.subr.mxu0 0.0
  %578 = vmatpush2.msra.mxu0 0.0
  %579 = vmatprep.subr.mxu0 0.0
  %580 = vmatpush2.msra.mxu0 0.0
  %581 = vmatprep.subr.mxu0 0.0
  %582 = vmatpush2.msra.mxu0 0.0
  %583 = vmatprep.subr.mxu0 0.0
  %584 = vmatpush2.msra.mxu0 0.0
  %585 = vmatprep.mubr.f32.mxu0 0.0
  %586 = vmatmul.mubr.f32.gmra.mxu0 %v183
  %v587 = vpop.f32.mrf.mxu0
  %v588 = vadd.f32 %v483, %v587
  %v589 = vpop.f32.mrf.mxu0
  %590 = vmatprep.mubr.f32.mxu0 0.0
  %591 = vmatmul.mubr.f32.gmra.mxu0 %v186
  %v592 = vpop.f32.mrf.mxu0
  %v593 = vadd.f32 %v488, %v592
  %v594 = vpop.f32.mrf.mxu0
  %595 = vmatprep.mubr.f32.mxu0 0.0
  %596 = vmatmul.mubr.f32.gmra.mxu0 %v189
  %v597 = vpop.f32.mrf.mxu0
  %v598 = vadd.f32 %v493, %v597
  %v599 = vpop.f32.mrf.mxu0
  %600 = vmatprep.mubr.f32.mxu0 0.0
  %601 = vmatmul.mubr.f32.gmra.mxu0 %v192
  %v602 = vpop.f32.mrf.mxu0
  %v603 = vadd.f32 %v498, %v602
  %v604 = vpop.f32.mrf.mxu0
  %605 = vmatprep.mubr.f32.mxu0 0.0
  %606 = vmatmul.mubr.f32.gmra.mxu0 %v195
  %v607 = vpop.f32.mrf.mxu0
  %v608 = vadd.f32 %v503, %v607
  %v609 = vpop.f32.mrf.mxu0
  %610 = vmatprep.mubr.f32.mxu0 0.0
  %611 = vmatmul.mubr.f32.gmra.mxu0 %v198
  %v612 = vpop.f32.mrf.mxu0
  %v613 = vadd.f32 %v508, %v612
  %v614 = vpop.f32.mrf.mxu0
  %615 = vmatprep.mubr.f32.mxu0 0.0
  %616 = vmatmul.mubr.f32.gmra.mxu0 %v201
  %v617 = vpop.f32.mrf.mxu0
  %v618 = vadd.f32 %v513, %v617
  %v619 = vpop.f32.mrf.mxu0
  %620 = vmatprep.mubr.f32.mxu0 0.0
  %621 = vmatmul.mubr.f32.gmra.mxu0 %v204
  %v622 = vpop.f32.mrf.mxu0
  %v623 = vadd.f32 %v518, %v622
  %v624 = vpop.f32.mrf.mxu0
  %625 = vdwg.mxu0
  %v626 = vmax.f32 %v588, 0.0
  %v627 = vmax.f32 %v593, 0.0
  %v628 = vmax.f32 %v598, 0.0
  %v629 = vmax.f32 %v603, 0.0
  %v630 = vmax.f32 %v608, 0.0
  %v631 = vmax.f32 %v613, 0.0
  %v632 = vmax.f32 %v618, 0.0
  %v633 = vmax.f32 %v623, 0.0
  %v634 = vld [vmem:[%s3] sm:$0xff]
  %v635 = vld [vmem:[%s3 + $0x8] sm:$0xff]
  %v636 = vld [vmem:[%s3 + $0x10] sm:$0xff]
  %v637 = vld [vmem:[%s3 + $0x18] sm:$0xff]
  %v638 = vld [vmem:[%s3 + $0x20] sm:$0xff]
  %v639 = vld [vmem:[%s3 + $0x28] sm:$0xff]
  %v640 = vld [vmem:[%s3 + $0x30] sm:$0xff]
  %v641 = vld [vmem:[%s3 + $0x38] sm:$0xff]
  %v642 = vld [vmem:[%s4] sm:$0x1]
  %v644 = vlaneseq
  %v645 = vshrl.u32 %v644, 7
  %v646 = vsub.s32 0, %v645
  %v647 = vrot.slane %v642, %v646
  %vm649 = vcmask 523264
  %v651 = vsel %vm649, %v626, 0
  %v654 = vsel %vm649, %v627, 0
  %v657 = vsel %vm649, %v628, 0
  %v660 = vsel %vm649, %v629, 0
  %v663 = vsel %vm649, %v630, 0
  %v666 = vsel %vm649, %v631, 0
  %v669 = vsel %vm649, %v632, 0
  %v672 = vsel %vm649, %v633, 0
  %674 = vmatprep.subr.mxu0 0.0
  %675 = vmatpush1.msra.mxu0 0.0
  %676 = vmatprep.subr.mxu0 0.0
  %677 = vmatpush1.msra.mxu0 0.0
  %678 = vmatprep.subr.mxu0 0.0
  %679 = vmatpush1.msra.mxu0 0.0
  %680 = vmatprep.subr.mxu0 0.0
  %681 = vmatpush1.msra.mxu0 0.0
  %682 = vmatprep.subr.mxu0 0.0
  %683 = vmatpush1.msra.mxu0 0.0
  %684 = vmatprep.subr.mxu0 0.0
  %685 = vmatpush1.msra.mxu0 0.0
  %686 = vmatprep.subr.mxu0 0.0
  %687 = vmatpush1.msra.mxu0 0.0
  %688 = vmatprep.subr.mxu0 0.0
  %689 = vmatpush1.msra.mxu0 0.0
  %690 = vmatprep.subr.mxu0 0.0
  %691 = vmatpush1.msra.mxu0 %v641
  %692 = vmatprep.subr.mxu0 0.0
  %693 = vmatpush1.msra.mxu0 %v640
  %694 = vmatprep.subr.mxu0 0.0
  %695 = vmatpush1.msra.mxu0 %v639
  %696 = vmatprep.subr.mxu0 0.0
  %697 = vmatpush1.msra.mxu0 %v638
  %698 = vmatprep.subr.mxu0 0.0
  %699 = vmatpush1.msra.mxu0 %v637
  %700 = vmatprep.subr.mxu0 0.0
  %701 = vmatpush1.msra.mxu0 %v636
  %702 = vmatprep.subr.mxu0 0.0
  %703 = vmatpush1.msra.mxu0 %v635
  %704 = vmatprep.subr.mxu0 0.0
  %705 = vmatpush1.msra.mxu0 %v634
  %706 = vmatprep.subr.mxu0 0.0
  %707 = vmatpush2.msra.mxu0 0.0
  %708 = vmatprep.subr.mxu0 0.0
  %709 = vmatpush2.msra.mxu0 0.0
  %710 = vmatprep.subr.mxu0 0.0
  %711 = vmatpush2.msra.mxu0 0.0
  %712 = vmatprep.subr.mxu0 0.0
  %713 = vmatpush2.msra.mxu0 0.0
  %714 = vmatprep.subr.mxu0 0.0
  %715 = vmatpush2.msra.mxu0 0.0
  %716 = vmatprep.subr.mxu0 0.0
  %717 = vmatpush2.msra.mxu0 0.0
  %718 = vmatprep.subr.mxu0 0.0
  %719 = vmatpush2.msra.mxu0 0.0
  %720 = vmatprep.subr.mxu0 0.0
  %721 = vmatpush2.msra.mxu0 0.0
  %722 = vmatprep.subr.mxu0 0.0
  %723 = vmatpush2.msra.mxu0 0.0
  %724 = vmatprep.subr.mxu0 0.0
  %725 = vmatpush2.msra.mxu0 0.0
  %726 = vmatprep.subr.mxu0 0.0
  %727 = vmatpush2.msra.mxu0 0.0
  %728 = vmatprep.subr.mxu0 0.0
  %729 = vmatpush2.msra.mxu0 0.0
  %730 = vmatprep.subr.mxu0 0.0
  %731 = vmatpush2.msra.mxu0 0.0
  %732 = vmatprep.subr.mxu0 0.0
  %733 = vmatpush2.msra.mxu0 0.0
  %734 = vmatprep.subr.mxu0 0.0
  %735 = vmatpush2.msra.mxu0 0.0
  %736 = vmatprep.subr.mxu0 0.0
  %737 = vmatpush2.msra.mxu0 0.0
  %738 = vmatprep.mubr.f32.mxu0 0.0
  %739 = vmatmul.mubr.f32.gmra.mxu0 %v651
  %v740 = vpop.f32.mrf.mxu0
  %v741 = vadd.f32 %v647, %v740
  %v742 = vpop.f32.mrf.mxu0
  %743 = vmatprep.mubr.f32.mxu0 0.0
  %744 = vmatmul.mubr.f32.gmra.mxu0 %v654
  %v745 = vpop.f32.mrf.mxu0
  %v746 = vadd.f32 %v647, %v745
  %v747 = vpop.f32.mrf.mxu0
  %748 = vmatprep.mubr.f32.mxu0 0.0
  %749 = vmatmul.mubr.f32.gmra.mxu0 %v657
  %v750 = vpop.f32.mrf.mxu0
  %v751 = vadd.f32 %v647, %v750
  %v752 = vpop.f32.mrf.mxu0
  %753 = vmatprep.mubr.f32.mxu0 0.0
  %754 = vmatmul.mubr.f32.gmra.mxu0 %v660
  %v755 = vpop.f32.mrf.mxu0
  %v756 = vadd.f32 %v647, %v755
  %v757 = vpop.f32.mrf.mxu0
  %758 = vmatprep.mubr.f32.mxu0 0.0
  %759 = vmatmul.mubr.f32.gmra.mxu0 %v663
  %v760 = vpop.f32.mrf.mxu0
  %v761 = vadd.f32 %v647, %v760
  %v762 = vpop.f32.mrf.mxu0
  %763 = vmatprep.mubr.f32.mxu0 0.0
  %764 = vmatmul.mubr.f32.gmra.mxu0 %v666
  %v765 = vpop.f32.mrf.mxu0
  %v766 = vadd.f32 %v647, %v765
  %v767 = vpop.f32.mrf.mxu0
  %768 = vmatprep.mubr.f32.mxu0 0.0
  %769 = vmatmul.mubr.f32.gmra.mxu0 %v669
  %v770 = vpop.f32.mrf.mxu0
  %v771 = vadd.f32 %v647, %v770
  %v772 = vpop.f32.mrf.mxu0
  %773 = vmatprep.mubr.f32.mxu0 0.0
  %774 = vmatmul.mubr.f32.gmra.mxu0 %v672
  %v775 = vpop.f32.mrf.mxu0
  %v776 = vadd.f32 %v647, %v775
  %v777 = vpop.f32.mrf.mxu0
  %778 = vdwg.mxu0
  %vm779 = vcmask 80896
  %780 = vst.msk [vmem:[%s5] sm:$0xff] %vm779, %v741
  %781 = vst.msk [vmem:[%s5 + $0x8] sm:$0xff] %vm779, %v746
  %782 = vst.msk [vmem:[%s5 + $0x10] sm:$0xff] %vm779, %v751
  %783 = vst.msk [vmem:[%s5 + $0x18] sm:$0xff] %vm779, %v756
  %784 = vst.msk [vmem:[%s5 + $0x20] sm:$0xff] %vm779, %v761
  %785 = vst.msk [vmem:[%s5 + $0x28] sm:$0xff] %vm779, %v766
  %786 = vst.msk [vmem:[%s5 + $0x30] sm:$0xff] %vm779, %v771
  %787 = vst.msk [vmem:[%s5 + $0x38] sm:$0xff] %vm779, %v776
  // Predicated region
  $region22: #{nn_forward.1} parent=0 // pred_check
    _
  $region23: #{nn_forward.1} parent=0 // pred_check_branch
    %789 = sbr.rel (0) target = $region25
  $region24: #{nn_forward.1} parent=0 // pred_region
    _
  $region25: #{nn_forward.1} parent=0 // pred_fallthru
    _
  // Predicated region
  $region26: #{nn_forward.1} parent=0 // pred_check
    _
  $region27: #{nn_forward.1} parent=0 // pred_check_branch
    %791 = sbr.rel (0) target = $region29
  $region28: #{nn_forward.1} parent=0 // pred_region
    _
  $region29: #{nn_forward.1} parent=0 // pred_fallthru
    _

</llo_original>
